<compile_context>
chip_gen: v7x
topology: tpu7x:2x2x1
jax: 0.10.0
libtpu: 0.0.40
codegen_flags: <defaults>
</compile_context>

<pallas_src>
import functools

import jax
import jax.numpy as jnp
from jax.experimental import pallas as pl
from jax.experimental.pallas import tpu as pltpu


def _mtlcnn_folded_kernel(patches_ref, w_eff_ref, b_eff_ref, out_ref):
    # patches_ref : (1, B, L*K) VMEM   im2col patches of task j (lane-dense rows)
    # w_eff_ref   : (1, 1, L*K) VMEM   folded conv+head weights of task j
    # b_eff_ref   : (J,)        SMEM   folded bias table (whole array, resident)
    # out_ref     : (1, B, 1)   VMEM   per-task predictions
    j = pl.program_id(0)
    prod = patches_ref[0] * w_eff_ref[0]                  # (B, L*K)  f32 VPU, lane-dense
    acc = jnp.sum(prod, axis=-1, keepdims=True)           # (B, 1)    single lane reduce
    out_ref[0] = acc + b_eff_ref[j]                       # scalar bias broadcast


@functools.partial(jax.jit, static_argnames=("k", "s"))
def _mtlcnn_forward_impl(x, w_conv, b_conv, w_head, b_head, *, k, s):
    # x: (J, B, C, S, S) float32
    J, B, C, S, _ = x.shape
    H = w_conv.shape[0]
    latn = lonn = (S - k) // s + 1
    L = latn * lonn
    K = k * k * C

    # -------- wrapper-side layout plumbing (XLA; no kernel FLOPs) --------
    # NCHW -> NHWC, then im2col: rows ordered l = oh*lonn + ow, cols ordered (ki, kj, c).
    x_nhwc = jnp.transpose(x, (0, 1, 3, 4, 2))                         # (J, B, S, S, C)
    cols = []
    for ki in range(k):
        for kj in range(k):
            cols.append(x_nhwc[:, :, ki: ki + (latn - 1) * s + 1: s,
                                      kj: kj + (lonn - 1) * s + 1: s, :])
    patches = jnp.concatenate(cols, axis=-1)                           # (J, B, latn, lonn, K)
    patches = patches.reshape(J, B, L * K)                             # lane-dense rows

    # Conv weight (H, C, k, k) -> (K, H) with (ki, kj, c) ordering matching the patches.
    w_conv_f = jnp.transpose(w_conv, (2, 3, 1, 0)).reshape(K, H)
    # Head weight rows follow the PyTorch flatten order (h, oh, ow); permute to (l, h).
    w_head_p = w_head.reshape(J, H, latn, lonn).transpose(0, 2, 3, 1).reshape(J, L, H)

    # Fold the per-task head into the conv weights / biases (exact up to f32
    # reassociation; HIGHEST precision so the fold adds no bf16 matmul error).
    w_eff = jnp.einsum("kh,jlh->jlk", w_conv_f, w_head_p,
                       precision=jax.lax.Precision.HIGHEST)            # (J, L, K)
    w_eff = w_eff.reshape(J, 1, L * K)
    b_eff = b_head.reshape(J) + jnp.sum(w_head_p * b_conv[None, None, :], axis=(1, 2))

    cost = pl.CostEstimate(
        flops=2 * J * B * L * K,
        transcendentals=0,
        bytes_accessed=4 * (J * B * L * K + J * L * K + J + J * B),
    )

    out = pl.pallas_call(
        _mtlcnn_folded_kernel,
        out_shape=jax.ShapeDtypeStruct((J, B, 1), jnp.float32),
        grid_spec=pltpu.PrefetchScalarGridSpec(
            num_scalar_prefetch=0,
            grid=(J,),                                                  # one task per step
            in_specs=[
                pl.BlockSpec((1, B, L * K), lambda j: (j, 0, 0),
                             memory_space=pltpu.MemorySpace.VMEM),
                pl.BlockSpec((1, 1, L * K), lambda j: (j, 0, 0),
                             memory_space=pltpu.MemorySpace.VMEM),
                pl.BlockSpec(memory_space=pltpu.MemorySpace.SMEM),      # bias table
            ],
            out_specs=pl.BlockSpec((1, B, 1), lambda j: (j, 0, 0),
                                   memory_space=pltpu.MemorySpace.VMEM),
        ),
        compiler_params=pltpu.CompilerParams(
            dimension_semantics=("parallel",),            # both v7x TCs; no-op on v5e/v6e
            allow_input_fusion=[True, False, False],      # fuse im2col chain into operand 0
        ),
        cost_estimate=cost,
    )(patches, w_eff, b_eff)
    return out                                            # (J, B, 1)


def mtlcnn_forward(inputs_list, aux, params, cfg):
    """Pallas forward matching MTLCNN.forward (eval mode)."""
    del aux  # unused by the reference forward
    x = jnp.stack([xi.astype(jnp.float32) for xi in inputs_list], axis=0)  # (J,B,C,S,S)
    out = _mtlcnn_forward_impl(x, params['w_conv'], params['b_conv'],
                               params['w_head'], params['b_head'],
                               k=cfg['kernel_size'], s=cfg['stride_cnn'])
    J = out.shape[0]
    # PyTorch returns a list of per-task (B, 1) predictions.
    return [out[j] for j in range(J)]


def mtlcnn_reference(inputs_list, aux, params, cfg):
    """Pure-JAX reference with identical (eval-mode) semantics."""
    del aux
    k, s = cfg['kernel_size'], cfg['stride_cnn']
    w_conv, b_conv = params['w_conv'], params['b_conv']
    w_head, b_head = params['w_head'], params['b_head']
    outs = []
    for j, xi in enumerate(inputs_list):
        xb = xi.astype(jnp.float32)
        y = jax.lax.conv_general_dilated(
            xb, w_conv, window_strides=(s, s), padding='VALID',
            dimension_numbers=('NCHW', 'OIHW', 'NCHW'),
            precision=jax.lax.Precision.HIGHEST)
        y = y + b_conv[None, :, None, None]
        y = y.reshape(y.shape[0], -1)                                   # (B, H*latn*lonn)
        outs.append(jnp.dot(y, w_head[j][:, None],
                            precision=jax.lax.Precision.HIGHEST) + b_head[j][None, :])
    return outs


if __name__ == "__main__":
    cfg = {
        'spatial_offset': 7,      # input spatial size = 2*7 + 1 = 15
        'kernel_size': 3,
        'stride_cnn': 2,
        'input_size_cnn': 4,
        'hidden_size': 16,
        'dropout_rate': 0.1,      # identity at inference
        'num_repeat': 2,          # two task heads
    }
    J = cfg['num_repeat']
    B = 2
    C = cfg['input_size_cnn']
    S = 2 * cfg['spatial_offset'] + 1
    k = cfg['kernel_size']
    st = cfg['stride_cnn']
    H = cfg['hidden_size']
    latn = lonn = (S - k) // st + 1
    F = H * latn * lonn

    key = jax.random.PRNGKey(0)
    kc, kcb, kh, khb, *kx = jax.random.split(key, 4 + J)
    s_conv = 1.0 / jnp.sqrt(jnp.float32(C * k * k))
    s_head = 1.0 / jnp.sqrt(jnp.float32(F))
    params = {
        'w_conv': jax.random.uniform(kc, (H, C, k, k), jnp.float32, -s_conv, s_conv),
        'b_conv': jax.random.uniform(kcb, (H,), jnp.float32, -s_conv, s_conv),
        'w_head': jax.random.uniform(kh, (J, F), jnp.float32, -s_head, s_head),
        'b_head': jax.random.uniform(khb, (J, 1), jnp.float32, -s_head, s_head),
    }
    inputs_ = [jax.random.normal(kx[j], (B, C, S, S), jnp.float32) for j in range(J)]
    aux = None  # unused by the forward pass

    preds = mtlcnn_forward(inputs_, aux, params, cfg)
    preds = [jax.block_until_ready(p) for p in preds]

    refs = mtlcnn_reference(inputs_, aux, params, cfg)
    for got, want in zip(preds, refs):
        assert got.shape == (B, 1), got.shape
        err = float(jnp.max(jnp.abs(got - want)))
        assert jnp.allclose(got, want, atol=1e-3, rtol=1e-3), err

    print("KERNEL_OK")
</pallas_src>

<mosaic_0001>
module attributes {stable_mosaic.version = 11 : i64} {
  func.func @_mtlcnn_folded_kernel(%arg0: i32, %arg1: memref<1x2x1764xf32, #tpu.memory_space<vmem>>, %arg2: memref<1x1x1764xf32, #tpu.memory_space<vmem>>, %arg3: memref<2xf32, #tpu.memory_space<smem>>, %arg4: memref<1x2x1xf32, #tpu.memory_space<vmem>>) attributes {dimension_semantics = [#tpu.dimension_semantics<parallel>], iteration_bounds = array<i64: 2>, scalar_prefetch = 0 : i64, scratch_operands = 0 : i64, tpu.core_type = #tpu.core_type<tc>, window_params = [{transform_indices = @transform_0, window_bounds = array<i64: 1, 2, 1764>}, {transform_indices = @transform_1, window_bounds = array<i64: 1, 1, 1764>}, {transform_indices = @transform_2, window_bounds = array<i64: 2>}, {transform_indices = @transform_3, window_bounds = array<i64: 1, 2, 1>}]} {
    %c0 = arith.constant 0 : index
    %c0_0 = arith.constant 0 : index
    %c0_1 = arith.constant 0 : index
    %0 = vector.load %arg1[%c0, %c0_0, %c0_1] : memref<1x2x1764xf32, #tpu.memory_space<vmem>>, vector<1x2x1764xf32>
    %1 = vector.shape_cast %0 : vector<1x2x1764xf32> to vector<2x1764xf32>
    %c0_2 = arith.constant 0 : index
    %c0_3 = arith.constant 0 : index
    %c0_4 = arith.constant 0 : index
    %2 = vector.load %arg2[%c0_2, %c0_3, %c0_4] : memref<1x1x1764xf32, #tpu.memory_space<vmem>>, vector<1x1x1764xf32>
    %3 = vector.shape_cast %2 : vector<1x1x1764xf32> to vector<1x1764xf32>
    %4 = vector.broadcast %3 : vector<1x1764xf32> to vector<2x1764xf32>
    %5 = arith.mulf %1, %4 : vector<2x1764xf32>
    %cst = arith.constant dense<0.000000e+00> : vector<2xf32>
    %6 = vector.multi_reduction <add>, %5, %cst [1] : vector<2x1764xf32> to vector<2xf32>
    %7 = vector.shape_cast %6 : vector<2xf32> to vector<2x1xf32>
    %8 = arith.index_cast %arg0 : i32 to index
    %9 = memref.load %arg3[%8] : memref<2xf32, #tpu.memory_space<smem>>
    %10 = vector.broadcast %9 : f32 to vector<2x1xf32>
    %11 = arith.addf %7, %10 : vector<2x1xf32>
    %c0_5 = arith.constant 0 : index
    %c0_6 = arith.constant 0 : index
    %c0_7 = arith.constant 0 : index
    %12 = vector.load %arg4[%c0_5, %c0_6, %c0_7] : memref<1x2x1xf32, #tpu.memory_space<vmem>>, vector<1x2x1xf32>
    %13 = vector.shape_cast %12 : vector<1x2x1xf32> to vector<2x1xf32>
    %14 = vector.shape_cast %11 : vector<2x1xf32> to vector<1x2x1xf32>
    tpu.vector_store %arg4[%c0_5, %c0_6, %c0_7], %14 {strides = array<i32>} : memref<1x2x1xf32, #tpu.memory_space<vmem>>, vector<1x2x1xf32>,
    return
  }
  func.func @transform_0(%arg0: i32) -> (i32, i32, i32) {
    %c0_i32 = arith.constant 0 : i32
    %c0_i32_0 = arith.constant 0 : i32
    %c0_i32_1 = arith.constant 0 : i32
    return %arg0, %c0_i32, %c0_i32_0 : i32, i32, i32
  }
  func.func @transform_1(%arg0: i32) -> (i32, i32, i32) {
    %c0_i32 = arith.constant 0 : i32
    %c0_i32_0 = arith.constant 0 : i32
    %c0_i32_1 = arith.constant 0 : i32
    return %arg0, %c0_i32, %c0_i32_0 : i32, i32, i32
  }
  func.func @transform_2(%arg0: i32) -> i32 {
    %c0_i32 = arith.constant 0 : i32
    %c0_i32_0 = arith.constant 0 : i32
    return %c0_i32 : i32
  }
  func.func @transform_3(%arg0: i32) -> (i32, i32, i32) {
    %c0_i32 = arith.constant 0 : i32
    %c0_i32_0 = arith.constant 0 : i32
    %c0_i32_1 = arith.constant 0 : i32
    return %arg0, %c0_i32, %c0_i32_0 : i32, i32, i32
  }
}

</mosaic_0001>

<llo_original>
// kernel: _mtlcnn_forward_impl.1
$region0: #{_mtlcnn_forward_impl.1}
  #allocation0 [shape = 'u32[]', space=smem, size = 0x4, offset = 0x4, fixed_abs, tag = 'smem constant byte address 0x4 - core index']
  #allocation1 [shape = 'u32[144,128]{1,0:T(1,128)}', space=vmem, size = 0x12000, scoped, tag = 'internal scratch']
  %s0 = inlined_call_operand.vmem [shape: f32[2,2,1764], index: 0, kind: input, shape index: {}]
  %s1 = inlined_call_operand.vmem [shape: f32[2,1,1764], index: 1, kind: input, shape index: {}]
  %s2 = inlined_call_operand.vmem [shape: f32[2], index: 2, kind: input, shape index: {}]
  %s3 = inlined_call_operand.vmem [shape: f32[2,2,1], index: 3, kind: output, shape index: {}]
  %s4 = sld [smem:[#allocation0]]
  $region49: #{_mtlcnn_forward_impl.1} parent=0
    _
  %s6 = ssub.s32 1, %s4
  %s7 = scalar_select 0, %s6, %s4
  $region1: #{_mtlcnn_forward_impl.1} parent=0
    #allocation2 [shape = 'u8[512]{0}', space=smem, size = 0x200, scoped, tag = 'input window, operand 2, single buffered']
    #allocation3 [shape = 's32[2]{0}', space=sflag, size = 0x8, scoped, tag = 'scoped memory for _mtlcnn_forward_impl.1']
    %8 = vsyncpa [#allocation3], 0
    loop: start=0, step=1, limit=4
    $region2: #{_mtlcnn_forward_impl.1} parent=1 // loop_pre_header
      _
    $region3: #{_mtlcnn_forward_impl.1} parent=1 // loop_header
      %s10 = sphi 0, %s14
      %p11 = scmp.ge.s32.totalorder %s10, 4
      %s20 = sphi 0, %s22
      %s23 = sphi 0, %s20
      %s24 = sphi 0, %s23
      %s40 = sphi 0, %s24
      %s46 = sphi 0, %s48
      %s49 = sphi 0, %s46
      %s50 = sphi 0, %s49
      %s66 = sphi 0, %s50
      %s70 = sphi 0, %s70
      %s72 = sphi 0, %s70
      %s73 = sphi 0, %s72
      %s87 = sphi 0, %s73
      %s93 = sphi 0, %s95
      %s96 = sphi 0, %s93
      %s97 = sphi 0, %s96
      %s113 = sphi 0, %s97
    $region4: #{_mtlcnn_forward_impl.1} parent=1 // loop_header_branch
      %13 = sbr.rel (%p11) target = $region8
    $region5: #{_mtlcnn_forward_impl.1} parent=1 // loop_body
      %s15 = ssub.s32 %s10, 1
      %s16 = ssub.s32 %s10, 2
      %s17 = sadd.s32 %s10, 1
      %s18 = ssub.s32 %s10, %s17
      %p19 = scmp.eq.s32.totalorder %s18, 0
      %s21 = sadd.s32 %s20, 1
      %s22 = scalar_select %p19, %s20, %s21
      %p25 = pneg %p19
      %p26 = scmp.eq.s32.totalorder %s10, 1
      %p27 = por %p25, %p26
      %p28 = scmp.ne.s32.totalorder %s20, %s23
      %p29 = scmp.eq.s32.totalorder %s10, 0
      %p30 = por %p28, %p29
      %p31 = scmp.ne.s32.totalorder %s20, %s23
      %p32 = scmp.eq.s32.totalorder %s15, 1
      %p33 = por %p31, %p32
      %p34 = scmp.ne.s32.totalorder %s23, %s24
      %p35 = scmp.eq.s32.totalorder %s15, 0
      %p36 = por %p34, %p35
      %p37 = scmp.ne.s32.totalorder %s23, %s24
      %p38 = scmp.eq.s32.totalorder %s16, 1
      %p39 = por %p37, %p38
      %p41 = scmp.ne.s32.totalorder %s24, %s40
      %p42 = scmp.eq.s32.totalorder %s16, 0
      %p43 = por %p41, %p42
      %s44 = ssub.s32 %s10, %s17
      %p45 = scmp.eq.s32.totalorder %s44, 0
      %s47 = sadd.s32 %s46, 1
      %s48 = scalar_select %p45, %s46, %s47
      %p51 = pneg %p45
      %p52 = scmp.eq.s32.totalorder %s10, 1
      %p53 = por %p51, %p52
      %p54 = scmp.ne.s32.totalorder %s46, %s49
      %p55 = scmp.eq.s32.totalorder %s10, 0
      %p56 = por %p54, %p55
      %p57 = scmp.ne.s32.totalorder %s46, %s49
      %p58 = scmp.eq.s32.totalorder %s15, 1
      %p59 = por %p57, %p58
      %p60 = scmp.ne.s32.totalorder %s49, %s50
      %p61 = scmp.eq.s32.totalorder %s15, 0
      %p62 = por %p60, %p61
      %p63 = scmp.ne.s32.totalorder %s49, %s50
      %p64 = scmp.eq.s32.totalorder %s16, 1
      %p65 = por %p63, %p64
      %p67 = scmp.ne.s32.totalorder %s50, %s66
      %p68 = scmp.eq.s32.totalorder %s16, 0
      %p69 = por %p67, %p68
      %s71 = sadd.s32 %s70, 1
      %p74 = scmp.eq.s32.totalorder %s10, 1
      %p75 = scmp.ne.s32.totalorder %s70, %s72
      %p76 = scmp.eq.s32.totalorder %s10, 0
      %p77 = por %p75, %p76
      %p78 = scmp.ne.s32.totalorder %s70, %s72
      %p79 = scmp.eq.s32.totalorder %s15, 1
      %p80 = por %p78, %p79
      %p81 = scmp.ne.s32.totalorder %s72, %s73
      %p82 = scmp.eq.s32.totalorder %s15, 0
      %p83 = por %p81, %p82
      %p84 = scmp.ne.s32.totalorder %s72, %s73
      %p85 = scmp.eq.s32.totalorder %s16, 1
      %p86 = por %p84, %p85
      %p88 = scmp.ne.s32.totalorder %s73, %s87
      %p89 = scmp.eq.s32.totalorder %s16, 0
      %p90 = por %p88, %p89
      %s91 = ssub.s32 %s10, %s17
      %p92 = scmp.eq.s32.totalorder %s91, 0
      %s94 = sadd.s32 %s93, 1
      %s95 = scalar_select %p92, %s93, %s94
      %p98 = pneg %p92
      %p99 = scmp.eq.s32.totalorder %s10, 1
      %p100 = por %p98, %p99
      %p101 = scmp.ne.s32.totalorder %s93, %s96
      %p102 = scmp.eq.s32.totalorder %s10, 0
      %p103 = por %p101, %p102
      %p104 = scmp.ne.s32.totalorder %s93, %s96
      %p105 = scmp.eq.s32.totalorder %s15, 1
      %p106 = por %p104, %p105
      %p107 = scmp.ne.s32.totalorder %s96, %s97
      %p108 = scmp.eq.s32.totalorder %s15, 0
      %p109 = por %p107, %p108
      %p110 = scmp.ne.s32.totalorder %s96, %s97
      %p111 = scmp.eq.s32.totalorder %s16, 1
      %p112 = por %p110, %p111
      %p114 = scmp.ne.s32.totalorder %s97, %s113
      %p115 = scmp.eq.s32.totalorder %s16, 0
      %p116 = por %p114, %p115
      %p117 = scmp.le.s32.totalorder 1, %s10
      %p118 = scmp.lt.s32.totalorder %s10, 3
      %p119 = pnand %p117, %p118
      %p120 = pneg %p119
      // Predicated region
      $region9: #{_mtlcnn_forward_impl.1} parent=5 // pred_check
        _
      $region10: #{_mtlcnn_forward_impl.1} parent=5 // pred_check_branch
        %122 = sbr.rel (%p119) target = $region12
      $region11: #{_mtlcnn_forward_impl.1} parent=5 // pred_region
        %s123 = ssub.s32 %s10, 1
        // Predicated region
        $region13: #{_mtlcnn_forward_impl.1} parent=11 // pred_check
          %p124 = pneg %p83
        $region14: #{_mtlcnn_forward_impl.1} parent=11 // pred_check_branch
          %126 = sbr.rel (%p124) target = $region16
        $region15: #{_mtlcnn_forward_impl.1} parent=11 // pred_region
          %s128 = ssub.s32 16, 16
          %129 = vsyncadd [#allocation3], %s128
          %s131 = sshll.u32 %s2, 4
          %s132 = int_to_ptr.vmem [resolvable:$true] %s131
          %134 = dma.vmem_to_smem %s132, 16, [#allocation2], [#allocation3]
        $region16: #{_mtlcnn_forward_impl.1} parent=11 // pred_fallthru
          _
      $region12: #{_mtlcnn_forward_impl.1} parent=5 // pred_fallthru
        _
      %p135 = scmp.lt.s32.totalorder %s10, 2
      // Predicated region
      $region17: #{_mtlcnn_forward_impl.1} parent=5 // pred_check
        %p136 = pneg %p135
      $region18: #{_mtlcnn_forward_impl.1} parent=5 // pred_check_branch
        %138 = sbr.rel (%p136) target = $region20
      $region19: #{_mtlcnn_forward_impl.1} parent=5 // pred_region
        // Predicated region
        $region21: #{_mtlcnn_forward_impl.1} parent=19 // pred_check
          %p139 = pneg %p30
        $region22: #{_mtlcnn_forward_impl.1} parent=19 // pred_check_branch
          %141 = sbr.rel (%p139) target = $region24
        $region23: #{_mtlcnn_forward_impl.1} parent=19 // pred_region
          %p142 = scmp.lt.s32.totalorder %s10, 1
          %s143 = scalar_select %p142, %s10, 1
          %s144 = smul.addr %s143, 14
          %s145 = smul.addr %s144, 2
          %s146 = scalar_lea.vmem %s0, %s145
        $region24: #{_mtlcnn_forward_impl.1} parent=19 // pred_fallthru
          _
        // Predicated region
        $region25: #{_mtlcnn_forward_impl.1} parent=19 // pred_check
          %p147 = pneg %p56
        $region26: #{_mtlcnn_forward_impl.1} parent=19 // pred_check_branch
          %149 = sbr.rel (%p147) target = $region28
        $region27: #{_mtlcnn_forward_impl.1} parent=19 // pred_region
          %p150 = scmp.lt.s32.totalorder %s10, 1
          %s151 = scalar_select %p150, %s10, 1
          %s152 = smul.addr %s151, 14
          %s153 = scalar_lea.vmem %s1, %s152
        $region28: #{_mtlcnn_forward_impl.1} parent=19 // pred_fallthru
          _
      $region20: #{_mtlcnn_forward_impl.1} parent=5 // pred_fallthru
        _
      %p154 = scmp.le.s32.totalorder 1, %s10
      %p155 = scmp.lt.s32.totalorder %s10, 3
      %p156 = pnand %p154, %p155
      %p157 = pneg %p156
      // Predicated region
      $region29: #{_mtlcnn_forward_impl.1} parent=5 // pred_check
        _
      $region30: #{_mtlcnn_forward_impl.1} parent=5 // pred_check_branch
        %159 = sbr.rel (%p156) target = $region32
      $region31: #{_mtlcnn_forward_impl.1} parent=5 // pred_region
        %s160 = ssub.s32 %s10, 1
        // Predicated region
        $region33: #{_mtlcnn_forward_impl.1} parent=31 // pred_check
          %p161 = pneg %p83
        $region34: #{_mtlcnn_forward_impl.1} parent=31 // pred_check_branch
          %163 = sbr.rel (%p161) target = $region36
        $region35: #{_mtlcnn_forward_impl.1} parent=31 // pred_region
          %164 = dma.done [#allocation3], 16
        $region36: #{_mtlcnn_forward_impl.1} parent=31 // pred_fallthru
          _
        %165 = sfence
        %p166 = scmp.lt.s32.totalorder %s15, 1
        %s167 = scalar_select %p166, %s15, 1
        %s168 = smul.addr %s167, 14
        %s169 = smul.addr %s168, 2
        %s170 = scalar_lea.vmem %s0, %s169
        %p171 = pneg %p36
        %p172 = pneg %p33
        %p173 = scmp.lt.s32.totalorder %s15, 1
        %s174 = scalar_select %p173, %s15, 1
        %s175 = smul.addr %s174, 14
        %s176 = scalar_lea.vmem %s1, %s175
        %p177 = pneg %p62
        %p178 = pneg %p59
        %p179 = pneg %p83
        %p180 = pneg %p80
        %p181 = pneg %p109
        %p182 = pneg %p106
        %p183 = scmp.lt.s32.totalorder %s15, 1
        %s184 = scalar_select %p183, %s15, 1
        %s185 = smul.addr %s184, 2
        %s186 = scalar_lea.vmem %s3, %s185
        %p187 = scmp.lt.s32.totalorder %s15, 1
        %s188 = scalar_select %p187, %s15, 1
        %s189 = smul.addr %s188, 14
        %s190 = smul.addr %s189, 2
        %s191 = scalar_lea.vmem %s0, %s190
        %p192 = scmp.lt.s32.totalorder %s15, 1
        %s193 = scalar_select %p192, %s15, 1
        %s194 = smul.addr %s193, 14
        %s195 = scalar_lea.vmem %s1, %s194
        %p196 = scmp.lt.s32.totalorder %s15, 1
        %s197 = scalar_select %p196, %s15, 1
        %s198 = smul.addr %s197, 2
        %s199 = scalar_lea.vmem %s3, %s198
        %v200 = vld [vmem:[%s191] sm:$0xff]
        %v201 = vld [vmem:[%s191 + $0x8] sm:$0xff]
        %v202 = vld [vmem:[%s191 + $0x10] sm:$0xff]
        %v203 = vld [vmem:[%s191 + $0x18] sm:$0xf]
        %v204 = vld [vmem:[%s195] sm:$0xff]
        %v205 = vld [vmem:[%s195 + $0x8] sm:$0x3f]
        %v208 = vlaneseq
        %v209 = vshrl.u32 %v208, 7
        %v210 = vsub.s32 0, %v209
        %v211 = vrot.slane %v204, %v210
        %v212 = vlaneseq
        %v213 = vshrl.u32 %v212, 7
        %v214 = vsub.s32 1, %v213
        %v215 = vrot.slane %v204, %v214
        %v216 = vlaneseq
        %v217 = vshrl.u32 %v216, 7
        %v218 = vsub.s32 2, %v217
        %v219 = vrot.slane %v204, %v218
        %v220 = vlaneseq
        %v221 = vshrl.u32 %v220, 7
        %v222 = vsub.s32 3, %v221
        %v223 = vrot.slane %v204, %v222
        %v224 = vlaneseq
        %v225 = vshrl.u32 %v224, 7
        %v226 = vsub.s32 4, %v225
        %v227 = vrot.slane %v204, %v226
        %v228 = vlaneseq
        %v229 = vshrl.u32 %v228, 7
        %v230 = vsub.s32 5, %v229
        %v231 = vrot.slane %v204, %v230
        %v232 = vlaneseq
        %v233 = vshrl.u32 %v232, 7
        %v234 = vsub.s32 6, %v233
        %v235 = vrot.slane %v204, %v234
        %v236 = vlaneseq
        %v237 = vshrl.u32 %v236, 7
        %v238 = vsub.s32 7, %v237
        %v239 = vrot.slane %v204, %v238
        %v240 = vlaneseq
        %v241 = vshrl.u32 %v240, 7
        %v242 = vsub.s32 0, %v241
        %v243 = vrot.slane %v205, %v242
        %v244 = vlaneseq
        %v245 = vshrl.u32 %v244, 7
        %v246 = vsub.s32 1, %v245
        %v247 = vrot.slane %v205, %v246
        %v248 = vlaneseq
        %v249 = vshrl.u32 %v248, 7
        %v250 = vsub.s32 2, %v249
        %v251 = vrot.slane %v205, %v250
        %v252 = vlaneseq
        %v253 = vshrl.u32 %v252, 7
        %v254 = vsub.s32 3, %v253
        %v255 = vrot.slane %v205, %v254
        %v256 = vlaneseq
        %v257 = vshrl.u32 %v256, 7
        %v258 = vsub.s32 4, %v257
        %v259 = vrot.slane %v205, %v258
        %v260 = vlaneseq
        %v261 = vshrl.u32 %v260, 7
        %v262 = vsub.s32 5, %v261
        %v263 = vrot.slane %v205, %v262
        %v264 = vcombine.low %v211, %v215
        %v265 = vcombine.low %v219, %v223
        %v267 = vunpack.c.l.s4 1983009808
        %v268 = vunpack.c.0.s8 %v267
        %v269 = vlaneseq
        %v270 = vshrl.u32 %v269, 7
        %v271 = vsub.s32 %v268, %v270
        %v272 = vrot.slane %v264, %v271
        %v274 = vunpack.c.l.s4 1983009808
        %v275 = vunpack.c.0.s8 %v274
        %v276 = vlaneseq
        %v277 = vshrl.u32 %v276, 7
        %v278 = vsub.s32 %v275, %v277
        %v279 = vrot.slane %v265, %v278
        %v280 = vcombine.low %v272, %v279
        %v281 = vcombine.low %v227, %v231
        %v282 = vcombine.low %v235, %v239
        %v284 = vunpack.c.l.s4 1983009808
        %v285 = vunpack.c.0.s8 %v284
        %v286 = vlaneseq
        %v287 = vshrl.u32 %v286, 7
        %v288 = vsub.s32 %v285, %v287
        %v289 = vrot.slane %v281, %v288
        %v291 = vunpack.c.l.s4 1983009808
        %v292 = vunpack.c.0.s8 %v291
        %v293 = vlaneseq
        %v294 = vshrl.u32 %v293, 7
        %v295 = vsub.s32 %v292, %v294
        %v296 = vrot.slane %v282, %v295
        %v297 = vcombine.low %v289, %v296
        %v298 = vcombine.low %v243, %v247
        %v299 = vcombine.low %v251, %v255
        %v301 = vunpack.c.l.s4 1983009808
        %v302 = vunpack.c.0.s8 %v301
        %v303 = vlaneseq
        %v304 = vshrl.u32 %v303, 7
        %v305 = vsub.s32 %v302, %v304
        %v306 = vrot.slane %v298, %v305
        %v308 = vunpack.c.l.s4 1983009808
        %v309 = vunpack.c.0.s8 %v308
        %v310 = vlaneseq
        %v311 = vshrl.u32 %v310, 7
        %v312 = vsub.s32 %v309, %v311
        %v313 = vrot.slane %v299, %v312
        %v314 = vcombine.low %v306, %v313
        %v315 = vcombine.low %v259, %v263
        %v317 = vunpack.c.l.s4 1983009808
        %v318 = vunpack.c.0.s8 %v317
        %v319 = vlaneseq
        %v320 = vshrl.u32 %v319, 7
        %v321 = vsub.s32 %v318, %v320
        %v322 = vrot.slane %v315, %v321
        %v327 = vmul.f32 %v200, %v280
        %v328 = vmul.f32 %v201, %v297
        %v329 = vmul.f32 %v202, %v314
        %v330 = vmul.f32 %v203, %v322
        %v335 = vcombine.high %v327, %v327
        %v337 = vunpack.c.l.s4 1983009808
        %v338 = vunpack.c.0.s8 %v337
        %v339 = vlaneseq
        %v340 = vshrl.u32 %v339, 7
        %v341 = vsub.s32 %v338, %v340
        %v342 = vrot.slane %v327, %v341
        %v344 = vunpack.c.l.s4 1983009808
        %v345 = vunpack.c.0.s8 %v344
        %v346 = vlaneseq
        %v347 = vshrl.u32 %v346, 7
        %v348 = vsub.s32 %v345, %v347
        %v349 = vrot.slane %v335, %v348
        %v350 = vcombine.high %v342, %v342
        %v351 = vcombine.high %v349, %v349
        %v352 = vcombine.high %v328, %v328
        %v354 = vunpack.c.l.s4 1983009808
        %v355 = vunpack.c.0.s8 %v354
        %v356 = vlaneseq
        %v357 = vshrl.u32 %v356, 7
        %v358 = vsub.s32 %v355, %v357
        %v359 = vrot.slane %v328, %v358
        %v361 = vunpack.c.l.s4 1983009808
        %v362 = vunpack.c.0.s8 %v361
        %v363 = vlaneseq
        %v364 = vshrl.u32 %v363, 7
        %v365 = vsub.s32 %v362, %v364
        %v366 = vrot.slane %v352, %v365
        %v367 = vcombine.high %v359, %v359
        %v368 = vcombine.high %v366, %v366
        %v369 = vcombine.high %v329, %v329
        %v371 = vunpack.c.l.s4 1983009808
        %v372 = vunpack.c.0.s8 %v371
        %v373 = vlaneseq
        %v374 = vshrl.u32 %v373, 7
        %v375 = vsub.s32 %v372, %v374
        %v376 = vrot.slane %v329, %v375
        %v378 = vunpack.c.l.s4 1983009808
        %v379 = vunpack.c.0.s8 %v378
        %v380 = vlaneseq
        %v381 = vshrl.u32 %v380, 7
        %v382 = vsub.s32 %v379, %v381
        %v383 = vrot.slane %v369, %v382
        %v384 = vcombine.high %v376, %v376
        %v385 = vcombine.high %v383, %v383
        %v387 = vunpack.c.l.s4 1983009808
        %v388 = vunpack.c.0.s8 %v387
        %v389 = vlaneseq
        %v390 = vshrl.u32 %v389, 7
        %v391 = vsub.s32 %v388, %v390
        %v392 = vrot.slane %v330, %v391
        %v393 = vcombine.high %v392, %v392
        %vm408 = vcmask 1041408
        %v409 = vsel %vm408, %v342, 0.0
        %v410 = vsel %vm408, %v350, 0.0
        %v411 = vadd.f32 %v409, %v410
        %v412 = vsel %vm408, %v349, 0.0
        %v413 = vadd.f32 %v411, %v412
        %v414 = vsel %vm408, %v351, 0.0
        %v415 = vadd.f32 %v413, %v414
        %v416 = vsel %vm408, %v359, 0.0
        %v417 = vadd.f32 %v415, %v416
        %v418 = vsel %vm408, %v367, 0.0
        %v419 = vadd.f32 %v417, %v418
        %v420 = vsel %vm408, %v366, 0.0
        %v421 = vadd.f32 %v419, %v420
        %v422 = vsel %vm408, %v368, 0.0
        %v423 = vadd.f32 %v421, %v422
        %v424 = vsel %vm408, %v376, 0.0
        %v425 = vadd.f32 %v423, %v424
        %v426 = vsel %vm408, %v384, 0.0
        %v427 = vadd.f32 %v425, %v426
        %v428 = vsel %vm408, %v383, 0.0
        %v429 = vadd.f32 %v427, %v428
        %v430 = vsel %vm408, %v385, 0.0
        %v431 = vadd.f32 %v429, %v430
        %v432 = vsel %vm408, %v392, 0.0
        %v433 = vadd.f32 %v431, %v432
        %vm434 = vcmask 812032
        %v435 = vsel %vm434, %v393, 0.0
        %v436 = vadd.f32 %v433, %v435
        %437 = vadd.xlane.f32.xlu0 %v436
        %v438 = vpop.xlane.xlu0 %437
        %s439 = sld [smem:[#allocation2 + %s15]]
        %v440 = vstv %s439
        %v441 = vadd.f32 %v438, %v440
        %vm442 = vcmask 1024
        %443 = vst.msk [vmem:[%s199] sm:$0x3] %vm442, %v441
        %p444 = scmp.lt.s32.totalorder %s15, 1
        %s445 = scalar_select %p444, %s15, 1
        %s446 = smul.addr %s445, 2
        %s447 = scalar_lea.vmem %s3, %s446
        // Predicated region
        $region37: #{_mtlcnn_forward_impl.1} parent=31 // pred_check
          %p448 = pneg %p106
        $region38: #{_mtlcnn_forward_impl.1} parent=31 // pred_check_branch
          %450 = sbr.rel (%p448) target = $region40
        $region39: #{_mtlcnn_forward_impl.1} parent=31 // pred_region
          _
        $region40: #{_mtlcnn_forward_impl.1} parent=31 // pred_fallthru
          _
      $region32: #{_mtlcnn_forward_impl.1} parent=5 // pred_fallthru
        _
      %p451 = scmp.le.s32.totalorder 2, %s10
      // Predicated region
      $region41: #{_mtlcnn_forward_impl.1} parent=5 // pred_check
        %p452 = pneg %p451
      $region42: #{_mtlcnn_forward_impl.1} parent=5 // pred_check_branch
        %454 = sbr.rel (%p452) target = $region44
      $region43: #{_mtlcnn_forward_impl.1} parent=5 // pred_region
        %s455 = ssub.s32 %s10, 2
        // Predicated region
        $region45: #{_mtlcnn_forward_impl.1} parent=43 // pred_check
          %p456 = pneg %p112
        $region46: #{_mtlcnn_forward_impl.1} parent=43 // pred_check_branch
          %458 = sbr.rel (%p456) target = $region48
        $region47: #{_mtlcnn_forward_impl.1} parent=43 // pred_region
          %p459 = scmp.lt.s32.totalorder %s16, 1
          %s460 = scalar_select %p459, %s16, 1
          %s461 = smul.addr %s460, 2
          %s462 = scalar_lea.vmem %s3, %s461
        $region48: #{_mtlcnn_forward_impl.1} parent=43 // pred_fallthru
          _
      $region44: #{_mtlcnn_forward_impl.1} parent=5 // pred_fallthru
        _
    $region6: #{_mtlcnn_forward_impl.1} parent=1 // loop_footer
      %s14 = sadd.s32 1, %s10
    $region7: #{_mtlcnn_forward_impl.1} parent=1 // loop_footer_branch
      %9 = sbr.rel target = $region3
    $region8: #{_mtlcnn_forward_impl.1} parent=1 // loop_exit
      _
    %463 = vsyncpa [#allocation3], 1
    %s464 = scalar_lea.sflag [#allocation3], 1
    %465 = vsyncpa %s464, 1

</llo_original>
